<compile_context>
chip_gen: v5e
topology: v5e:2x2
jax: 0.10.0
libtpu: 0.0.40
codegen_flags: <defaults>
</compile_context>

<pallas_src>
import functools

import jax
import jax.numpy as jnp
from jax.experimental import pallas as pl
from jax.experimental.pallas import tpu as pltpu


# ----------------------------------------------------------------------------
# helpers
# ----------------------------------------------------------------------------
def _fit_tile(dim, target):
    """Largest tile <= target (by halving) that evenly divides dim."""
    if dim <= target:
        return dim
    t = target
    while t >= 8:
        if dim % t == 0:
            return t
        t //= 2
    return dim


def _vmem_capacity_bytes():
    """Generation-aware VMEM capacity; falls back to v7x-safe 64 MiB."""
    try:
        info = pltpu.get_tpu_info()
        for name in ("vmem_capacity_bytes", "vmem_size_bytes", "vmem_bytes"):
            cap = getattr(info, name, None)
            if cap:
                return int(cap)
    except Exception:
        pass
    return 64 * 2**20


# ----------------------------------------------------------------------------
# Tiled linear kernel:  y = x @ W_t + b   (W_t pre-transposed to (K, N))
# ----------------------------------------------------------------------------
def _linear_kernel(x_ref, w_ref, b_ref, o_ref, acc_ref):
    k = pl.program_id(2)

    @pl.when(k == 0)
    def _():
        acc_ref[...] = jnp.zeros_like(acc_ref)

    acc_ref[...] += jnp.dot(x_ref[...], w_ref[...],
                            preferred_element_type=jnp.float32)

    @pl.when(k == pl.num_programs(2) - 1)
    def _():
        o_ref[...] = (acc_ref[...] + b_ref[...].astype(jnp.float32)).astype(o_ref.dtype)


def pallas_linear(x, w_t, b, *, tm=512, tn=512, tk=512):
    """x: (M, K), w_t: (K, N) [pre-transposed], b: (N,) -> (M, N) in x.dtype."""
    M, K = x.shape
    K2, N = w_t.shape
    assert K == K2
    tm = _fit_tile(M, tm)
    tn = _fit_tile(N, tn)
    tk = _fit_tile(K, tk)
    grid = (M // tm, N // tn, K // tk)
    b2 = b.reshape(1, N)

    in_bytes = x.dtype.itemsize
    est = (2 * (tm * tk + tk * tn) * in_bytes + 2 * tn * b.dtype.itemsize
           + 2 * tm * tn * in_bytes + tm * tn * 4)
    cap = _vmem_capacity_bytes()
    vmem_limit = int(min(int(cap * 0.9), max(32 * 2**20, 2 * est)))

    flops = 2 * M * N * K
    bytes_accessed = int((M * K + K * N + M * N) * in_bytes + N * 4)

    return pl.pallas_call(
        _linear_kernel,
        out_shape=jax.ShapeDtypeStruct((M, N), x.dtype),
        grid=grid,
        in_specs=[
            pl.BlockSpec((tm, tk), lambda i, j, kk: (i, kk)),
            pl.BlockSpec((tk, tn), lambda i, j, kk: (kk, j)),
            pl.BlockSpec((1, tn), lambda i, j, kk: (0, j)),
        ],
        out_specs=pl.BlockSpec((tm, tn), lambda i, j, kk: (i, j)),
        scratch_shapes=[pltpu.VMEM((tm, tn), jnp.float32)],
        compiler_params=pltpu.CompilerParams(
            dimension_semantics=("parallel", "parallel", "arbitrary"),
            vmem_limit_bytes=vmem_limit),
        cost_estimate=pl.CostEstimate(
            flops=flops, transcendentals=0, bytes_accessed=bytes_accessed),
    )(x, w_t, b2)


# ----------------------------------------------------------------------------
# DINT attention kernel (RoPE'd-K cache, query-tiled, two-pass column mean)
# ----------------------------------------------------------------------------
def _dint_attn_kernel(lam_ref, cos_ref, sin_ref,
                      q_ref, k_ref, q2_ref, k2_ref, v_ref,
                      o_ref, *rest,
                      scaling, inv_seq_len, two_pass, with_weights):
    if with_weights:
        w_ref, krot_ref, k2rot_ref, colsum_ref = rest
    else:
        krot_ref, k2rot_ref, colsum_ref = rest

    pass_idx = pl.program_id(3)
    qi = pl.program_id(4)
    lam = lam_ref[0]

    tq, d = q_ref.shape[2], q_ref.shape[3]
    mxu_dtype = q_ref.dtype

    def rope(x, cos, sin):
        # RoPE math in f32 on the VPU; `sin` already carries the rotate_half
        # sign pattern, so rotate_half(x) == roll(x, d/2, lanes) here.
        return x * cos + pltpu.roll(x, shift=d // 2, axis=1) * sin

    def row_softmax(s):
        m = jnp.max(s, axis=-1, keepdims=True)
        e = jnp.exp(s - m)
        den = jnp.sum(e, axis=-1, keepdims=True)
        inv = pl.reciprocal(den, approx=True)        # EUP slot
        inv = inv * (2.0 - den * inv)                # one Newton step -> ~f32
        return e * inv

    dn_qkT = (((1,), (1,)), ((), ()))                # contract head_dim of both
    dn_pv = (((1,), (0,)), ((), ()))

    # Cache RoPE(K) / RoPE(K2) once per (b, kv, rep); reused across pass/q-tile
    # axes.  Condition does not depend on the rep axis so it stays correct when
    # that axis is sharded across cores (megacore).
    @pl.when(jnp.logical_and(pass_idx == 0, qi == 0))
    def _():
        cos_full = cos_ref[0].astype(jnp.float32)
        sin_full = sin_ref[0].astype(jnp.float32)
        krot_ref[...] = rope(k_ref[0, 0].astype(jnp.float32),
                             cos_full, sin_full).astype(krot_ref.dtype)
        k2rot_ref[...] = rope(k2_ref[0, 0].astype(jnp.float32),
                              cos_full, sin_full).astype(k2rot_ref.dtype)

    row0 = qi * tq
    if tq % 8 == 0:
        row0 = pl.multiple_of(row0, 8)
    cos_q = cos_ref[0, pl.ds(row0, tq), :].astype(jnp.float32)
    sin_q = sin_ref[0, pl.ds(row0, tq), :].astype(jnp.float32)

    # Scaling folded into q (tq*D multiplies instead of tq*S on the scores).
    q = (rope(q_ref[0, 0].astype(jnp.float32), cos_q, sin_q) * scaling).astype(mxu_dtype)
    s1 = jax.lax.dot_general(q, krot_ref[...], dn_qkT,
                             preferred_element_type=jnp.float32)
    p1 = row_softmax(s1)                             # (tq, S) f32

    def finalize(col_sum):
        q2 = (rope(q2_ref[0, 0].astype(jnp.float32), cos_q, sin_q)
              * scaling).astype(mxu_dtype)
        s2 = jax.lax.dot_general(q2, k2rot_ref[...], dn_qkT,
                                 preferred_element_type=jnp.float32)
        p2 = row_softmax(s2)
        mean = col_sum * inv_seq_len                 # (1, S) mean over queries
        p = p1 + lam * mean - lam * p2
        v = v_ref[0, 0]
        out = jax.lax.dot_general(p.astype(v.dtype), v, dn_pv,
                                  preferred_element_type=jnp.float32)
        o_ref[0, 0] = out.astype(o_ref.dtype)
        if with_weights:
            w_ref[0, 0] = p.astype(w_ref.dtype)

    if two_pass:
        @pl.when(pass_idx == 0)
        def _():
            @pl.when(qi == 0)
            def _():
                colsum_ref[...] = jnp.zeros_like(colsum_ref)
            colsum_ref[...] += jnp.sum(p1, axis=0, keepdims=True)

        @pl.when(pass_idx == 1)
        def _():
            finalize(colsum_ref[...])
    else:
        # Single query tile -> the mean is available in this step already.
        finalize(jnp.sum(p1, axis=0, keepdims=True))


def _attn_vmem_estimate(tq, S, D, in_bytes, w_bytes, with_weights):
    kv_in = 3 * S * D * in_bytes * 2              # k, k2, v (double buffered)
    rot_in = 2 * S * D * 4 * 2                    # cos, sin (f32, full S)
    q_in = 2 * tq * D * in_bytes * 2              # q, q2 tiles
    o_out = tq * D * in_bytes * 2
    w_out = (tq * S * w_bytes * 2) if with_weights else 0
    cache = 2 * S * D * in_bytes                  # RoPE'd K / K2 scratch
    tmp = 8 * tq * S * 4 + 6 * tq * D * 4         # f32 intermediates
    return kv_in + rot_in + q_in + o_out + w_out + cache + tmp + S * 4


def pallas_dint_attention(q, k, q2, k2, v, cos, sin_signed, lambd, scaling, *,
                          q_tile_target=None, return_weights=True,
                          weights_dtype=None):
    """q/q2: (B,NH,S,D); k/k2/v: (B,NKV,S,D); cos/sin_signed: (B,S,D) f32.

    `sin_signed` must already carry the rotate_half sign pattern
    (negated first half).  lambd: (1,) f32.
    """
    B, NH, S, D = q.shape
    NKV = k.shape[1]
    n_rep = NH // NKV
    w_dtype = jnp.dtype(weights_dtype) if weights_dtype is not None else q.dtype
    in_bytes = q.dtype.itemsize
    w_bytes = jnp.dtype(w_dtype).itemsize

    cap = _vmem_capacity_bytes()
    budget = int(cap * 0.6)                       # ~76 MiB on 128 MiB, ~38 MiB v7x

    tq = S if q_tile_target is None else _fit_tile(S, q_tile_target)
    while (_attn_vmem_estimate(tq, S, D, in_bytes, w_bytes, return_weights)
           > budget and tq > 8 and tq % 2 == 0):
        tq //= 2
    n_qt = S // tq
    two_pass = n_qt > 1
    n_pass = 2 if two_pass else 1

    grid = (B, NKV, n_rep, n_pass, n_qt)

    q_spec = pl.BlockSpec((1, 1, tq, D), lambda b, kv, r, p, i: (b, kv * n_rep + r, i, 0))
    kv_spec = pl.BlockSpec((1, 1, S, D), lambda b, kv, r, p, i: (b, kv, 0, 0))
    cs_spec = pl.BlockSpec((1, S, D), lambda b, kv, r, p, i: (b, 0, 0))
    # Output blocks: during pass 0 the index is pinned to q-tile 0, so the
    # (unwritten) resident buffer is never flushed before pass 1 writes it.
    o_spec = pl.BlockSpec((1, 1, tq, D), lambda b, kv, r, p, i: (b, kv * n_rep + r, p * i, 0))
    w_spec = pl.BlockSpec((1, 1, tq, S), lambda b, kv, r, p, i: (b, kv * n_rep + r, p * i, 0))

    if return_weights:
        out_shape = (jax.ShapeDtypeStruct((B, NH, S, D), q.dtype),
                     jax.ShapeDtypeStruct((B, NH, S, S), w_dtype))
        out_specs = (o_spec, w_spec)
    else:
        out_shape = jax.ShapeDtypeStruct((B, NH, S, D), q.dtype)
        out_specs = o_spec

    est = _attn_vmem_estimate(tq, S, D, in_bytes, w_bytes, return_weights)
    vmem_limit = int(min(int(cap * 0.9), max(32 * 2**20, 2 * est)))

    flops = 2 * B * NH * S * S * D * (3 + (1 if two_pass else 0))
    transc = B * NH * S * S * (2 + (1 if two_pass else 0))
    bytes_accessed = int(
        (2 * B * NH * S * D) * in_bytes * (2 if two_pass else 1)   # q, q2
        + (3 * B * NKV * S * D) * in_bytes                          # k, k2, v
        + (2 * B * S * D) * 4                                       # cos, sin
        + (B * NH * S * D) * in_bytes                               # out
        + ((B * NH * S * S) * w_bytes if return_weights else 0))

    kernel = functools.partial(
        _dint_attn_kernel, scaling=float(scaling), inv_seq_len=1.0 / S,
        two_pass=two_pass, with_weights=return_weights)

    result = pl.pallas_call(
        kernel,
        out_shape=out_shape,
        grid=grid,
        in_specs=[
            pl.BlockSpec(memory_space=pltpu.MemorySpace.SMEM),  # lambd
            cs_spec,    # cos   (full S, f32)
            cs_spec,    # sin   (full S, f32, sign-folded)
            q_spec,     # q
            kv_spec,    # k     (repeat_kv is structural via index_map)
            q_spec,     # q2
            kv_spec,    # k2
            kv_spec,    # v
        ],
        out_specs=out_specs,
        scratch_shapes=[
            pltpu.VMEM((S, D), q.dtype),      # RoPE'd K cache
            pltpu.VMEM((S, D), q.dtype),      # RoPE'd K2 cache
            pltpu.VMEM((1, S), jnp.float32),  # column sum of softmax(QK^T)
        ],
        compiler_params=pltpu.CompilerParams(
            dimension_semantics=("parallel", "parallel", "parallel",
                                 "arbitrary", "arbitrary"),
            vmem_limit_bytes=vmem_limit),
        cost_estimate=pl.CostEstimate(
            flops=flops, transcendentals=transc, bytes_accessed=bytes_accessed),
    )(lambd, cos, sin_signed, q, k, q2, k2, v)

    if return_weights:
        return result[0], result[1]
    return result, None


# ----------------------------------------------------------------------------
# Parameter preparation (done once, not per forward call)
# ----------------------------------------------------------------------------
def prepare_params(params, compute_dtype=jnp.bfloat16):
    """Concatenate q/k/v/adapter-1 weights, pad to 128 lanes, transpose to
    (K, N), and cast to the compute dtype.  Biases stay f32 (added in f32)."""
    cdt = jnp.dtype(compute_dtype)

    fused_w = jnp.concatenate(
        [params["q_w"], params["k_w"], params["v_w"],
         params["aq1_w"], params["ak1_w"]], axis=0)          # (N, K)
    fused_b = jnp.concatenate(
        [params["q_b"], params["k_b"], params["v_b"],
         params["aq1_b"], params["ak1_b"]], axis=0)
    n_pad = (-fused_w.shape[0]) % 128                        # lane-dense stores
    if n_pad:
        fused_w = jnp.pad(fused_w, ((0, n_pad), (0, 0)))
        fused_b = jnp.pad(fused_b, ((0, n_pad),))

    def w_t(w):
        return jnp.asarray(w).T.astype(cdt)

    return {
        "fused_w": fused_w.T.astype(cdt),
        "fused_b": fused_b.astype(jnp.float32),
        "aq2_w": w_t(params["aq2_w"]), "aq2_b": params["aq2_b"].astype(jnp.float32),
        "ak2_w": w_t(params["ak2_w"]), "ak2_b": params["ak2_b"].astype(jnp.float32),
        "o_w": w_t(params["o_w"]),     "o_b": params["o_b"].astype(jnp.float32),
        "lambd": params["lambd"].astype(jnp.float32),
    }


# ----------------------------------------------------------------------------
# Full module forward
# ----------------------------------------------------------------------------
def llama_dint_forward(params, hidden_states, cos, sin, *, num_heads,
                       num_kv_heads, head_dim, return_weights=True,
                       q_tile_target=None):
    B, S, H = hidden_states.shape
    scaling = head_dim ** (-0.5)
    cdtype = params["fused_w"].dtype
    x2d = hidden_states.astype(cdtype).reshape(B * S, H)

    nq = num_heads * head_dim
    nkv = num_kv_heads * head_dim
    na_q = params["aq2_w"].shape[0]
    na_k = params["ak2_w"].shape[0]

    # One fused projection: x is streamed from HBM once for q/k/v/adapter-1.
    fused = pallas_linear(x2d, params["fused_w"], params["fused_b"])
    off = 0
    q_flat = fused[:, off:off + nq]; off += nq
    k_flat = fused[:, off:off + nkv]; off += nkv
    v_flat = fused[:, off:off + nkv]; off += nkv
    hq = fused[:, off:off + na_q]; off += na_q
    hk = fused[:, off:off + na_k]

    q2_flat = pallas_linear(hq, params["aq2_w"], params["aq2_b"])
    k2_flat = pallas_linear(hk, params["ak2_w"], params["ak2_b"])

    # TODO(synk): head split kept as XLA glue; fusing it into the attention
    #             BlockSpec index_map needs head_dim % 128 == 0 everywhere.
    def to_heads(y, nh):
        return y.reshape(B, S, nh, head_dim).transpose(0, 2, 1, 3)

    q = to_heads(q_flat, num_heads)
    k = to_heads(k_flat, num_kv_heads)
    v = to_heads(v_flat, num_kv_heads)
    q2 = to_heads(q2_flat, num_heads)
    k2 = to_heads(k2_flat, num_kv_heads)

    # Fold the rotate_half sign into sin once (saves a per-step VPU mul+iota).
    sign = jnp.concatenate([-jnp.ones((head_dim // 2,), jnp.float32),
                            jnp.ones((head_dim // 2,), jnp.float32)])
    cos_f32 = cos.astype(jnp.float32)
    sin_signed = sin.astype(jnp.float32) * sign

    attn_out, attn_w = pallas_dint_attention(
        q, k, q2, k2, v, cos_f32, sin_signed, params["lambd"], scaling,
        return_weights=return_weights, q_tile_target=q_tile_target)

    attn_2d = attn_out.transpose(0, 2, 1, 3).reshape(B * S, nq)
    out = pallas_linear(attn_2d, params["o_w"], params["o_b"]).reshape(B, S, H)
    return out, attn_w


# ----------------------------------------------------------------------------
# Pure-JAX reference (mirrors the PyTorch semantics) for verification
# ----------------------------------------------------------------------------
def _rotate_half(x):
    d = x.shape[-1]
    x1, x2 = x[..., : d // 2], x[..., d // 2:]
    return jnp.concatenate([-x2, x1], axis=-1)


def _ref_rope(q, k, cos, sin):
    cos = cos[:, None, :, :]
    sin = sin[:, None, :, :]
    return q * cos + _rotate_half(q) * sin, k * cos + _rotate_half(k) * sin


def reference_forward(params, hidden_states, cos, sin, *, num_heads,
                      num_kv_heads, head_dim):
    B, S, H = hidden_states.shape
    scaling = head_dim ** (-0.5)
    n_rep = num_heads // num_kv_heads

    def lin(x, w, b):
        return x @ w.T + b

    def to_heads(y, nh):
        return y.reshape(B, S, nh, head_dim).transpose(0, 2, 1, 3)

    x = hidden_states
    q = to_heads(lin(x, params["q_w"], params["q_b"]), num_heads)
    k = to_heads(lin(x, params["k_w"], params["k_b"]), num_kv_heads)
    v = to_heads(lin(x, params["v_w"], params["v_b"]), num_kv_heads)
    q2 = to_heads(lin(lin(x, params["aq1_w"], params["aq1_b"]),
                      params["aq2_w"], params["aq2_b"]), num_heads)
    k2 = to_heads(lin(lin(x, params["ak1_w"], params["ak1_b"]),
                      params["ak2_w"], params["ak2_b"]), num_kv_heads)

    q, k = _ref_rope(q, k, cos, sin)
    q2, k2 = _ref_rope(q2, k2, cos, sin)

    def repeat_kv(t):
        return jnp.repeat(t, n_rep, axis=1)

    k, k2, v = repeat_kv(k), repeat_kv(k2), repeat_kv(v)
    lam = params["lambd"][0]

    s1 = jnp.einsum("bhqd,bhkd->bhqk", q, k).astype(jnp.float32) * scaling
    p1 = jax.nn.softmax(s1, axis=-1)
    p1 = p1.mean(axis=-2, keepdims=True) * lam + p1
    s2 = jnp.einsum("bhqd,bhkd->bhqk", q2, k2).astype(jnp.float32) * scaling
    p = p1 - lam * jax.nn.softmax(s2, axis=-1)

    o = jnp.einsum("bhqk,bhkd->bhqd", p, v)
    o = o.transpose(0, 2, 1, 3).reshape(B, S, num_heads * head_dim)
    o = lin(o, params["o_w"], params["o_b"])
    return o, p


# ----------------------------------------------------------------------------
# Main
# ----------------------------------------------------------------------------
if __name__ == "__main__":
    NUM_HEADS = 2
    NUM_KV_HEADS = 1
    HEAD_DIM = 128
    HIDDEN = NUM_HEADS * HEAD_DIM          # 256
    ADAPTER_HEAD_DIM = 16
    LAMBD_INIT = 0.5                       # nonzero to exercise the DINT path

    key = jax.random.PRNGKey(0)
    ks = jax.random.split(key, 16)

    def init(k, shape, scale=0.1):
        return (scale * jax.random.normal(k, shape)).astype(jnp.float32)

    params = {
        # Llama projections (attention_bias=False -> zero biases)
        "q_w": init(ks[0], (NUM_HEADS * HEAD_DIM, HIDDEN)),
        "q_b": jnp.zeros((NUM_HEADS * HEAD_DIM,), jnp.float32),
        "k_w": init(ks[1], (NUM_KV_HEADS * HEAD_DIM, HIDDEN)),
        "k_b": jnp.zeros((NUM_KV_HEADS * HEAD_DIM,), jnp.float32),
        "v_w": init(ks[2], (NUM_KV_HEADS * HEAD_DIM, HIDDEN)),
        "v_b": jnp.zeros((NUM_KV_HEADS * HEAD_DIM,), jnp.float32),
        "o_w": init(ks[3], (HIDDEN, NUM_HEADS * HEAD_DIM)),
        "o_b": jnp.zeros((HIDDEN,), jnp.float32),
        # adapter_q_proj : Sequential(Linear(H, NH*A), Linear(NH*A, NH*D))
        "aq1_w": init(ks[4], (NUM_HEADS * ADAPTER_HEAD_DIM, HIDDEN)),
        "aq1_b": init(ks[5], (NUM_HEADS * ADAPTER_HEAD_DIM,)),
        "aq2_w": init(ks[6], (NUM_HEADS * HEAD_DIM, NUM_HEADS * ADAPTER_HEAD_DIM)),
        "aq2_b": init(ks[7], (NUM_HEADS * HEAD_DIM,)),
        # adapter_k_proj : Sequential(Linear(H, NKV*A), Linear(NKV*A, NKV*D))
        "ak1_w": init(ks[8], (NUM_KV_HEADS * ADAPTER_HEAD_DIM, HIDDEN)),
        "ak1_b": init(ks[9], (NUM_KV_HEADS * ADAPTER_HEAD_DIM,)),
        "ak2_w": init(ks[10], (NUM_KV_HEADS * HEAD_DIM, NUM_KV_HEADS * ADAPTER_HEAD_DIM)),
        "ak2_b": init(ks[11], (NUM_KV_HEADS * HEAD_DIM,)),
        "lambd": jnp.array([LAMBD_INIT], jnp.float32),
    }

    def make_rope(batch, seq):
        inv_freq = 1.0 / (10000.0 ** (jnp.arange(0, HEAD_DIM, 2, dtype=jnp.float32)
                                      / HEAD_DIM))
        pos = jnp.arange(seq, dtype=jnp.float32)
        freqs = pos[:, None] * inv_freq[None, :]
        emb = jnp.concatenate([freqs, freqs], axis=-1)
        return (jnp.broadcast_to(jnp.cos(emb)[None], (batch, seq, HEAD_DIM)),
                jnp.broadcast_to(jnp.sin(emb)[None], (batch, seq, HEAD_DIM)))

    prepared_f32 = prepare_params(params, compute_dtype=jnp.float32)
    prepared_bf16 = prepare_params(params, compute_dtype=jnp.bfloat16)

    fwd_kwargs = dict(num_heads=NUM_HEADS, num_kv_heads=NUM_KV_HEADS,
                      head_dim=HEAD_DIM)

    # ---- Test A: small shapes, f32 compute (tight correctness check) -------
    B, S = 2, 8
    hidden_states = init(ks[12], (B, S, HIDDEN), scale=1.0)
    cos, sin = make_rope(B, S)

    out_a, w_a = llama_dint_forward(prepared_f32, hidden_states, cos, sin,
                                    return_weights=True, **fwd_kwargs)
    jax.block_until_ready((out_a, w_a))
    ref_out, ref_w = reference_forward(params, hidden_states, cos, sin, **fwd_kwargs)
    assert out_a.shape == (B, S, HIDDEN)
    assert w_a.shape == (B, NUM_HEADS, S, S)
    assert jnp.allclose(out_a, ref_out, rtol=1e-3, atol=1e-3), "f32 output mismatch"
    assert jnp.allclose(w_a, ref_w, rtol=1e-3, atol=1e-3), "f32 weights mismatch"

    # ---- Test B: same shapes, bf16 compute path (loose check) --------------
    out_b, w_b = llama_dint_forward(prepared_bf16, hidden_states, cos, sin,
                                    return_weights=True, **fwd_kwargs)
    out_b_nw, _ = llama_dint_forward(prepared_bf16, hidden_states, cos, sin,
                                     return_weights=False, **fwd_kwargs)
    jax.block_until_ready((out_b, w_b, out_b_nw))
    assert jnp.allclose(out_b.astype(jnp.float32), ref_out, rtol=1e-1, atol=1e-1), \
        "bf16 output mismatch"
    assert jnp.allclose(w_b.astype(jnp.float32), ref_w, rtol=1e-1, atol=1e-1), \
        "bf16 weights mismatch"
    assert jnp.allclose(out_b_nw.astype(jnp.float32), ref_out, rtol=1e-1, atol=1e-1), \
        "bf16 no-weights path mismatch"

    # ---- Test C: two-pass / multi-q-tile path, f32 (tight check) -----------
    B2, S2 = 1, 256
    hidden2 = init(ks[13], (B2, S2, HIDDEN), scale=1.0)
    cos2, sin2 = make_rope(B2, S2)
    out_c, w_c = llama_dint_forward(prepared_f32, hidden2, cos2, sin2,
                                    return_weights=True, q_tile_target=128,
                                    **fwd_kwargs)
    jax.block_until_ready((out_c, w_c))
    ref_out2, ref_w2 = reference_forward(params, hidden2, cos2, sin2, **fwd_kwargs)
    assert jnp.allclose(out_c, ref_out2, rtol=2e-3, atol=2e-3), \
        "two-pass output mismatch"
    assert jnp.allclose(w_c, ref_w2, rtol=2e-3, atol=2e-3), \
        "two-pass weights mismatch"

    print("KERNEL_OK")
</pallas_src>

<mosaic_0001>
module attributes {stable_mosaic.version = 11 : i64} {
  func.func @_linear_kernel(%arg0: i32, %arg1: i32, %arg2: i32, %arg3: memref<16x256xf32, #tpu.memory_space<vmem>>, %arg4: memref<256x128xf32, #tpu.memory_space<vmem>>, %arg5: memref<1x128xf32, #tpu.memory_space<vmem>>, %arg6: memref<16x128xf32, #tpu.memory_space<vmem>>, %arg7: memref<16x128xf32, #tpu.memory_space<vmem>>) attributes {dimension_semantics = [#tpu.dimension_semantics<parallel>, #tpu.dimension_semantics<parallel>, #tpu.dimension_semantics<arbitrary>], iteration_bounds = array<i64: 1, 5, 1>, scalar_prefetch = 0 : i64, scratch_operands = 1 : i64, tpu.core_type = #tpu.core_type<tc>, window_params = [{transform_indices = @transform_0, window_bounds = array<i64: 16, 256>}, {transform_indices = @transform_1, window_bounds = array<i64: 256, 128>}, {transform_indices = @transform_2, window_bounds = array<i64: 1, 128>}, {transform_indices = @transform_3, window_bounds = array<i64: 16, 128>}]} {
    %c0_i32 = arith.constant 0 : i32
    %0 = arith.cmpi eq, %arg2, %c0_i32 : i32
    %1 = arith.extui %0 : i1 to i32
    %c0_i32_0 = arith.constant 0 : i32
    %2 = arith.cmpi ne, %1, %c0_i32_0 : i32
    scf.if %2 {
      %cst_10 = arith.constant 0.000000e+00 : f32
      %12 = vector.broadcast %cst_10 : f32 to vector<16x128xf32>
      %c0_11 = arith.constant 0 : index
      %c0_12 = arith.constant 0 : index
      %13 = vector.load %arg7[%c0_11, %c0_12] : memref<16x128xf32, #tpu.memory_space<vmem>>, vector<16x128xf32>
      tpu.vector_store %arg7[%c0_11, %c0_12], %12 {strides = array<i32>} : memref<16x128xf32, #tpu.memory_space<vmem>>, vector<16x128xf32>,
    } else {
    }
    %c0 = arith.constant 0 : index
    %c0_1 = arith.constant 0 : index
    %3 = vector.load %arg7[%c0, %c0_1] : memref<16x128xf32, #tpu.memory_space<vmem>>, vector<16x128xf32>
    %c0_2 = arith.constant 0 : index
    %c0_3 = arith.constant 0 : index
    %4 = vector.load %arg3[%c0_2, %c0_3] : memref<16x256xf32, #tpu.memory_space<vmem>>, vector<16x256xf32>
    %c0_4 = arith.constant 0 : index
    %c0_5 = arith.constant 0 : index
    %5 = vector.load %arg4[%c0_4, %c0_5] : memref<256x128xf32, #tpu.memory_space<vmem>>, vector<256x128xf32>
    %cst = arith.constant dense<0.000000e+00> : vector<16x128xf32>
    %6 = tpu.matmul %4, %5, %cst {dimension_numbers = #tpu.dot_dimension_numbers<[1], [0], [0], [1], [0, 0, 1, 1], [], []>} : vector<16x256xf32>, vector<256x128xf32>, vector<16x128xf32> -> vector<16x128xf32>
    %7 = arith.addf %3, %6 : vector<16x128xf32>
    %c0_6 = arith.constant 0 : index
    %c0_7 = arith.constant 0 : index
    %8 = vector.load %arg7[%c0_6, %c0_7] : memref<16x128xf32, #tpu.memory_space<vmem>>, vector<16x128xf32>
    tpu.vector_store %arg7[%c0_6, %c0_7], %7 {strides = array<i32>} : memref<16x128xf32, #tpu.memory_space<vmem>>, vector<16x128xf32>,
    %c0_i32_8 = arith.constant 0 : i32
    %9 = arith.cmpi eq, %arg2, %c0_i32_8 : i32
    %10 = arith.extui %9 : i1 to i32
    %c0_i32_9 = arith.constant 0 : i32
    %11 = arith.cmpi ne, %10, %c0_i32_9 : i32
    scf.if %11 {
      %c0_10 = arith.constant 0 : index
      %c0_11 = arith.constant 0 : index
      %12 = vector.load %arg7[%c0_10, %c0_11] : memref<16x128xf32, #tpu.memory_space<vmem>>, vector<16x128xf32>
      %c0_12 = arith.constant 0 : index
      %c0_13 = arith.constant 0 : index
      %13 = vector.load %arg5[%c0_12, %c0_13] : memref<1x128xf32, #tpu.memory_space<vmem>>, vector<1x128xf32>
      %14 = vector.broadcast %13 : vector<1x128xf32> to vector<16x128xf32>
      %15 = arith.addf %12, %14 : vector<16x128xf32>
      %c0_14 = arith.constant 0 : index
      %c0_15 = arith.constant 0 : index
      %16 = vector.load %arg6[%c0_14, %c0_15] : memref<16x128xf32, #tpu.memory_space<vmem>>, vector<16x128xf32>
      tpu.vector_store %arg6[%c0_14, %c0_15], %15 {strides = array<i32>} : memref<16x128xf32, #tpu.memory_space<vmem>>, vector<16x128xf32>,
    } else {
    }
    return
  }
  func.func @transform_0(%arg0: i32, %arg1: i32, %arg2: i32) -> (i32, i32) {
    %c0_i32 = arith.constant 0 : i32
    return %arg0, %arg2 : i32, i32
  }
  func.func @transform_1(%arg0: i32, %arg1: i32, %arg2: i32) -> (i32, i32) {
    %c0_i32 = arith.constant 0 : i32
    return %arg2, %arg1 : i32, i32
  }
  func.func @transform_2(%arg0: i32, %arg1: i32, %arg2: i32) -> (i32, i32) {
    %c0_i32 = arith.constant 0 : i32
    %c0_i32_0 = arith.constant 0 : i32
    return %c0_i32, %arg1 : i32, i32
  }
  func.func @transform_3(%arg0: i32, %arg1: i32, %arg2: i32) -> (i32, i32) {
    %c0_i32 = arith.constant 0 : i32
    return %arg0, %arg1 : i32, i32
  }
}

</mosaic_0001>

<llo_original>
// kernel: tpu_custom_call.1
$region0: #{tpu_custom_call.1}
  #allocation0 [shape = 'u32[]', space=smem, size = 0x4, offset = 0x4, fixed_abs, tag = 'smem constant byte address 0x4 - core index']
  #allocation1 [shape = 'u32[72,128]{1,0:T(1,128)}', space=vmem, size = 0x9000, scoped, tag = 'internal scratch']
  #allocation2 [shape = 'f32[16,128]{1,0:T(8,128)}', space=vmem, size = 0x2000, scoped, tag = 'scratch operand']
  %s0 = inlined_call_operand.hbm [shape: f32[16,256], index: 0, kind: input, shape index: {}]
  %s1 = inlined_call_operand.hbm [shape: f32[256,640], index: 1, kind: input, shape index: {}]
  %s2 = inlined_call_operand.hbm [shape: f32[1,640], index: 2, kind: input, shape index: {}]
  %s3 = inlined_call_operand.hbm [shape: f32[16,640], index: 3, kind: output, shape index: {}]
  %s4 = sld [smem:[#allocation0]]
  $region65: #{tpu_custom_call.1} parent=0
    _
  %s6 = ssub.s32 1, %s4
  %s7 = scalar_select 0, %s6, %s4
  $region1: #{tpu_custom_call.1} parent=0
    #allocation3 [shape = 'u8[16384]{0}', space=vmem, size = 0x4000, scoped, tag = 'input window, operand 0, single buffered']
    #allocation4 [shape = 's32[2]{0}', space=sflag, size = 0x8, scoped, tag = 'scoped memory for tpu_custom_call.1']
    #allocation5 [shape = 's32[2]{0}', space=sflag, size = 0x8, scoped, tag = 'scoped memory for tpu_custom_call.1']
    #allocation6 [shape = 'u8[262144]{0}', space=vmem, size = 0x40000, scoped, tag = 'input window, operand 1']
    #allocation7 [shape = 's32[2]{0}', space=sflag, size = 0x8, scoped, tag = 'scoped memory for tpu_custom_call.1']
    #allocation8 [shape = 'u8[1024]{0}', space=vmem, size = 0x400, scoped, tag = 'input window, operand 2']
    #allocation9 [shape = 'u8[16384]{0}', space=vmem, size = 0x4000, scoped, tag = 'output window, operand 0']
    %8 = vsyncpa [#allocation4], 0
    %9 = vsyncpa [#allocation7], 0
    %s10 = scalar_lea.sflag [#allocation7], 1
    %11 = vsyncpa %s10, 0
    %12 = vsyncpa [#allocation5], 0
    %s13 = scalar_lea.sflag [#allocation5], 1
    %14 = vsyncpa %s13, 0
    loop: start=0, step=1, limit=7
    $region2: #{tpu_custom_call.1} parent=1 // loop_pre_header
      _
    $region3: #{tpu_custom_call.1} parent=1 // loop_header
      %s16 = sphi 0, %s20
      %p17 = scmp.ge.s32.totalorder %s16, 7
      %s23 = sphi 0, %s42
      %s24 = sphi 0, %s38
      %s25 = sphi 0, %s34
      %s26 = sphi 0, %s23
      %s27 = sphi 0, %s24
      %s28 = sphi 0, %s25
      %s29 = sphi 0, %s26
      %s30 = sphi 0, %s27
      %s31 = sphi 0, %s28
      %s47 = sphi 0, %s49
      %s50 = sphi 0, %s47
      %s51 = sphi 0, %s50
      %s67 = sphi 0, %s51
      %s75 = sphi 0, %s77
      %s78 = sphi 0, %s75
      %s79 = sphi 0, %s78
      %s95 = sphi 0, %s79
      %s101 = sphi 0, %s103
      %s104 = sphi 0, %s101
      %s105 = sphi 0, %s104
      %s121 = sphi 0, %s105
      %s129 = sphi 0, %s131
      %s132 = sphi 0, %s129
      %s133 = sphi 0, %s132
      %s149 = sphi 0, %s133
    $region4: #{tpu_custom_call.1} parent=1 // loop_header_branch
      %19 = sbr.rel (%p17) target = $region8
    $region5: #{tpu_custom_call.1} parent=1 // loop_body
      %s21 = ssub.s32 %s16, 1
      %s22 = ssub.s32 %s16, 2
      %s32 = sadd.s32 1, %s25
      %p33 = scmp.ge.s32.totalorder %s32, 1
      %s34 = scalar_select %p33, 0, %s32
      %s35 = sadd.s32 1, %s24
      %s36 = scalar_select %p33, %s35, %s24
      %p37 = scmp.ge.s32.totalorder %s36, 5
      %s38 = scalar_select %p37, 0, %s36
      %s39 = sadd.s32 1, %s23
      %s40 = scalar_select %p37, %s39, %s23
      %p41 = scmp.ge.s32.totalorder %s40, 1
      %s42 = scalar_select %p41, 0, %s40
      %s43 = ssub.s32 %s23, %s42
      %s44 = ssub.s32 %s25, %s34
      %s45 = sor.u32 %s43, %s44
      %p46 = scmp.eq.s32.totalorder %s45, 0
      %s48 = sadd.s32 %s47, 1
      %s49 = scalar_select %p46, %s47, %s48
      %p52 = pneg %p46
      %p53 = scmp.eq.s32.totalorder %s16, 4
      %p54 = por %p52, %p53
      %p55 = scmp.ne.s32.totalorder %s47, %s50
      %p56 = scmp.eq.s32.totalorder %s16, 0
      %p57 = por %p55, %p56
      %p58 = scmp.ne.s32.totalorder %s47, %s50
      %p59 = scmp.eq.s32.totalorder %s21, 4
      %p60 = por %p58, %p59
      %p61 = scmp.ne.s32.totalorder %s50, %s51
      %p62 = scmp.eq.s32.totalorder %s21, 0
      %p63 = por %p61, %p62
      %p64 = scmp.ne.s32.totalorder %s50, %s51
      %p65 = scmp.eq.s32.totalorder %s22, 4
      %p66 = por %p64, %p65
      %p68 = scmp.ne.s32.totalorder %s51, %s67
      %p69 = scmp.eq.s32.totalorder %s22, 0
      %p70 = por %p68, %p69
      %s71 = ssub.s32 %s25, %s34
      %s72 = ssub.s32 %s24, %s38
      %s73 = sor.u32 %s71, %s72
      %p74 = scmp.eq.s32.totalorder %s73, 0
      %s76 = sadd.s32 %s75, 1
      %s77 = scalar_select %p74, %s75, %s76
      %p80 = pneg %p74
      %p81 = scmp.eq.s32.totalorder %s16, 4
      %p82 = por %p80, %p81
      %p83 = scmp.ne.s32.totalorder %s75, %s78
      %p84 = scmp.eq.s32.totalorder %s16, 0
      %p85 = por %p83, %p84
      %p86 = scmp.ne.s32.totalorder %s75, %s78
      %p87 = scmp.eq.s32.totalorder %s21, 4
      %p88 = por %p86, %p87
      %p89 = scmp.ne.s32.totalorder %s78, %s79
      %p90 = scmp.eq.s32.totalorder %s21, 0
      %p91 = por %p89, %p90
      %p92 = scmp.ne.s32.totalorder %s78, %s79
      %p93 = scmp.eq.s32.totalorder %s22, 4
      %p94 = por %p92, %p93
      %p96 = scmp.ne.s32.totalorder %s79, %s95
      %p97 = scmp.eq.s32.totalorder %s22, 0
      %p98 = por %p96, %p97
      %s99 = ssub.s32 %s24, %s38
      %p100 = scmp.eq.s32.totalorder %s99, 0
      %s102 = sadd.s32 %s101, 1
      %s103 = scalar_select %p100, %s101, %s102
      %p106 = pneg %p100
      %p107 = scmp.eq.s32.totalorder %s16, 4
      %p108 = por %p106, %p107
      %p109 = scmp.ne.s32.totalorder %s101, %s104
      %p110 = scmp.eq.s32.totalorder %s16, 0
      %p111 = por %p109, %p110
      %p112 = scmp.ne.s32.totalorder %s101, %s104
      %p113 = scmp.eq.s32.totalorder %s21, 4
      %p114 = por %p112, %p113
      %p115 = scmp.ne.s32.totalorder %s104, %s105
      %p116 = scmp.eq.s32.totalorder %s21, 0
      %p117 = por %p115, %p116
      %p118 = scmp.ne.s32.totalorder %s104, %s105
      %p119 = scmp.eq.s32.totalorder %s22, 4
      %p120 = por %p118, %p119
      %p122 = scmp.ne.s32.totalorder %s105, %s121
      %p123 = scmp.eq.s32.totalorder %s22, 0
      %p124 = por %p122, %p123
      %s125 = ssub.s32 %s23, %s42
      %s126 = ssub.s32 %s24, %s38
      %s127 = sor.u32 %s125, %s126
      %p128 = scmp.eq.s32.totalorder %s127, 0
      %s130 = sadd.s32 %s129, 1
      %s131 = scalar_select %p128, %s129, %s130
      %p134 = pneg %p128
      %p135 = scmp.eq.s32.totalorder %s16, 4
      %p136 = por %p134, %p135
      %p137 = scmp.ne.s32.totalorder %s129, %s132
      %p138 = scmp.eq.s32.totalorder %s16, 0
      %p139 = por %p137, %p138
      %p140 = scmp.ne.s32.totalorder %s129, %s132
      %p141 = scmp.eq.s32.totalorder %s21, 4
      %p142 = por %p140, %p141
      %p143 = scmp.ne.s32.totalorder %s132, %s133
      %p144 = scmp.eq.s32.totalorder %s21, 0
      %p145 = por %p143, %p144
      %p146 = scmp.ne.s32.totalorder %s132, %s133
      %p147 = scmp.eq.s32.totalorder %s22, 4
      %p148 = por %p146, %p147
      %p150 = scmp.ne.s32.totalorder %s133, %s149
      %p151 = scmp.eq.s32.totalorder %s22, 0
      %p152 = por %p150, %p151
      %p153 = scmp.le.s32.totalorder 1, %s16
      %p154 = scmp.lt.s32.totalorder %s16, 6
      %p155 = pnand %p153, %p154
      %p156 = pneg %p155
      // Predicated region
      $region9: #{tpu_custom_call.1} parent=5 // pred_check
        _
      $region10: #{tpu_custom_call.1} parent=5 // pred_check_branch
        %158 = sbr.rel (%p155) target = $region12
      $region11: #{tpu_custom_call.1} parent=5 // pred_region
        %s159 = ssub.s32 %s16, 1
        // Predicated region
        $region13: #{tpu_custom_call.1} parent=11 // pred_check
          %p160 = pneg %p63
        $region14: #{tpu_custom_call.1} parent=11 // pred_check_branch
          %162 = sbr.rel (%p160) target = $region16
        $region15: #{tpu_custom_call.1} parent=11 // pred_region
          %s163 = smul.u32 2, %s26
          %s164 = smul.u32 2, %s28
          %166 = vsyncadd [#allocation4], 0
          %s167 = smul.addr %s163, 2
          %s168 = sadd.s32 %s164, %s167
          %s169 = smul.addr %s168, 8
          %s170 = scalar_lea.hbm %s0, %s169
          %s171 = sshll.u32 %s170, 4
          %s172 = int_to_ptr.hbm [resolvable:$true] %s171
          %s173 = sshll.u32 [#allocation3], 4
          %s174 = int_to_ptr.vmem [resolvable:$true] %s173
          %179 = dma.hbm_to_vmem [thread:$0]  %s172, 512, %s174, [#allocation4], 256, 256, 16
        $region16: #{tpu_custom_call.1} parent=11 // pred_fallthru
          _
      $region12: #{tpu_custom_call.1} parent=5 // pred_fallthru
        _
      %p180 = scmp.lt.s32.totalorder %s16, 5
      // Predicated region
      $region17: #{tpu_custom_call.1} parent=5 // pred_check
        %p181 = pneg %p180
      $region18: #{tpu_custom_call.1} parent=5 // pred_check_branch
        %183 = sbr.rel (%p181) target = $region20
      $region19: #{tpu_custom_call.1} parent=5 // pred_region
        // Predicated region
        $region21: #{tpu_custom_call.1} parent=19 // pred_check
          %p184 = pneg %p85
        $region22: #{tpu_custom_call.1} parent=19 // pred_check_branch
          %186 = sbr.rel (%p184) target = $region24
        $region23: #{tpu_custom_call.1} parent=19 // pred_region
          %s187 = sand.u32 %s16, 1
          %s188 = scalar_lea.sflag [#allocation7], %s187
          %s189 = sand.u32 %s75, 1
          %s190 = smul.addr %s189, 256
          %s191 = scalar_lea.vmem [#allocation6], %s190
          %s192 = smul.u32 32, %s25
          %194 = vsyncadd %s188, 0
          %s195 = smul.addr %s192, 5
          %s196 = sadd.s32 %s24, %s195
          %s197 = smul.addr %s196, 8
          %s198 = scalar_lea.hbm %s1, %s197
          %s199 = sshll.u32 %s198, 4
          %s200 = int_to_ptr.hbm [resolvable:$true] %s199
          %s201 = sshll.u32 %s191, 4
          %s202 = int_to_ptr.vmem [resolvable:$true] %s201
          %207 = dma.hbm_to_vmem [thread:$0]  %s200, 4096, %s202, %s188, 640, 128, 8
        $region24: #{tpu_custom_call.1} parent=19 // pred_fallthru
          _
        // Predicated region
        $region25: #{tpu_custom_call.1} parent=19 // pred_check
          %p208 = pneg %p111
        $region26: #{tpu_custom_call.1} parent=19 // pred_check_branch
          %210 = sbr.rel (%p208) target = $region28
        $region27: #{tpu_custom_call.1} parent=19 // pred_region
          %s211 = sand.u32 %s16, 1
          %s212 = scalar_lea.sflag [#allocation7], %s211
          %s213 = sand.u32 %s101, 1
          %s214 = scalar_lea.vmem [#allocation8], %s213
          %216 = vsyncadd %s212, 0
          %s217 = scalar_lea.hbm %s2, %s24
          %s219 = sshll.u32 %s217, 4
          %s220 = int_to_ptr.hbm [resolvable:$true] %s219
          %s221 = sshll.u32 %s214, 4
          %s222 = int_to_ptr.vmem [resolvable:$true] %s221
          %224 = dma.hbm_to_vmem [thread:$0]  %s220, 16, %s222, %s212
        $region28: #{tpu_custom_call.1} parent=19 // pred_fallthru
          _
      $region20: #{tpu_custom_call.1} parent=5 // pred_fallthru
        _
      %p225 = scmp.le.s32.totalorder 1, %s16
      %p226 = scmp.lt.s32.totalorder %s16, 6
      %p227 = pnand %p225, %p226
      %p228 = pneg %p227
      // Predicated region
      $region29: #{tpu_custom_call.1} parent=5 // pred_check
        _
      $region30: #{tpu_custom_call.1} parent=5 // pred_check_branch
        %230 = sbr.rel (%p227) target = $region32
      $region31: #{tpu_custom_call.1} parent=5 // pred_region
        %s231 = ssub.s32 %s16, 1
        // Predicated region
        $region33: #{tpu_custom_call.1} parent=31 // pred_check
          %p232 = pneg %p63
        $region34: #{tpu_custom_call.1} parent=31 // pred_check_branch
          %234 = sbr.rel (%p232) target = $region36
        $region35: #{tpu_custom_call.1} parent=31 // pred_region
          %236 = dma.done [#allocation4], 512
        $region36: #{tpu_custom_call.1} parent=31 // pred_fallthru
          _
        %s237 = sand.u32 %s21, 1
        %s238 = scalar_lea.sflag [#allocation7], %s237
        %s239 = sand.u32 %s78, 1
        %s240 = smul.addr %s239, 256
        %s241 = scalar_lea.vmem [#allocation6], %s240
        // Predicated region
        $region37: #{tpu_custom_call.1} parent=31 // pred_check
          %p242 = pneg %p91
        $region38: #{tpu_custom_call.1} parent=31 // pred_check_branch
          %244 = sbr.rel (%p242) target = $region40
        $region39: #{tpu_custom_call.1} parent=31 // pred_region
          %246 = dma.done %s238, 4096
        $region40: #{tpu_custom_call.1} parent=31 // pred_fallthru
          _
        %s247 = sand.u32 %s21, 1
        %s248 = scalar_lea.sflag [#allocation7], %s247
        %s249 = sand.u32 %s104, 1
        %s250 = scalar_lea.vmem [#allocation8], %s249
        // Predicated region
        $region41: #{tpu_custom_call.1} parent=31 // pred_check
          %p251 = pneg %p117
        $region42: #{tpu_custom_call.1} parent=31 // pred_check_branch
          %253 = sbr.rel (%p251) target = $region44
        $region43: #{tpu_custom_call.1} parent=31 // pred_region
          %255 = dma.done %s248, 16
        $region44: #{tpu_custom_call.1} parent=31 // pred_fallthru
          _
        %p256 = pneg %p63
        %p257 = pneg %p60
        %s258 = sand.u32 %s21, 1
        %s259 = scalar_lea.sflag [#allocation7], %s258
        %s260 = sand.u32 %s78, 1
        %s261 = smul.addr %s260, 256
        %s262 = scalar_lea.vmem [#allocation6], %s261
        %p263 = pneg %p91
        %p264 = pneg %p88
        %s265 = sand.u32 %s21, 1
        %s266 = scalar_lea.sflag [#allocation7], %s265
        %s267 = sand.u32 %s104, 1
        %s268 = scalar_lea.vmem [#allocation8], %s267
        %p269 = pneg %p117
        %p270 = pneg %p114
        %p271 = pneg %p145
        %p272 = pneg %p142
        %s273 = sand.u32 %s132, 1
        %s274 = scalar_lea.sflag [#allocation5], %s273
        %s275 = sand.u32 %s132, 1
        %s276 = smul.addr %s275, 16
        %s277 = scalar_lea.vmem [#allocation9], %s276
        %s278 = smul.u32 2, %s26
        %s279 = smul.u32 2, %s28
        %s280 = smul.u32 32, %s28
        %s281 = smul.u32 2, %s26
        %p282 = scmp.eq.s32.totalorder %s28, 0
        // Predicated region
        $region45: #{tpu_custom_call.1} parent=31 // pred_check
          %p283 = pneg %p282
        $region46: #{tpu_custom_call.1} parent=31 // pred_check_branch
          %285 = sbr.rel (%p283) target = $region48
        $region47: #{tpu_custom_call.1} parent=31 // pred_region
          %286 = vst [vmem:[#allocation2] sm:$0xff] 0.0
          %287 = vst [vmem:[#allocation2 + $0x8] sm:$0xff] 0.0
        $region48: #{tpu_custom_call.1} parent=31 // pred_fallthru
          _
        %v288 = vld [vmem:[#allocation2] sm:$0xff]
        %v289 = vld [vmem:[#allocation2 + $0x8] sm:$0xff]
        %v290 = vld [vmem:[#allocation3] sm:$0xff]
        %v291 = vld [vmem:[#allocation3 + $0x8] sm:$0xff]
        %v292 = vld [vmem:[#allocation3 + $0x10] sm:$0xff]
        %v293 = vld [vmem:[#allocation3 + $0x18] sm:$0xff]
        %v294 = vld [vmem:[%s241] sm:$0xff]
        %v295 = vld [vmem:[%s241 + $0x8] sm:$0xff]
        %v296 = vld [vmem:[%s241 + $0x10] sm:$0xff]
        %v297 = vld [vmem:[%s241 + $0x18] sm:$0xff]
        %v298 = vld [vmem:[%s241 + $0x20] sm:$0xff]
        %v299 = vld [vmem:[%s241 + $0x28] sm:$0xff]
        %v300 = vld [vmem:[%s241 + $0x30] sm:$0xff]
        %v301 = vld [vmem:[%s241 + $0x38] sm:$0xff]
        %v302 = vld [vmem:[%s241 + $0x40] sm:$0xff]
        %v303 = vld [vmem:[%s241 + $0x48] sm:$0xff]
        %v304 = vld [vmem:[%s241 + $0x50] sm:$0xff]
        %v305 = vld [vmem:[%s241 + $0x58] sm:$0xff]
        %v306 = vld [vmem:[%s241 + $0x60] sm:$0xff]
        %v307 = vld [vmem:[%s241 + $0x68] sm:$0xff]
        %v308 = vld [vmem:[%s241 + $0x70] sm:$0xff]
        %v309 = vld [vmem:[%s241 + $0x78] sm:$0xff]
        %v310 = vld [vmem:[%s241 + $0x80] sm:$0xff]
        %v311 = vld [vmem:[%s241 + $0x88] sm:$0xff]
        %v312 = vld [vmem:[%s241 + $0x90] sm:$0xff]
        %v313 = vld [vmem:[%s241 + $0x98] sm:$0xff]
        %v314 = vld [vmem:[%s241 + $0xa0] sm:$0xff]
        %v315 = vld [vmem:[%s241 + $0xa8] sm:$0xff]
        %v316 = vld [vmem:[%s241 + $0xb0] sm:$0xff]
        %v317 = vld [vmem:[%s241 + $0xb8] sm:$0xff]
        %v318 = vld [vmem:[%s241 + $0xc0] sm:$0xff]
        %v319 = vld [vmem:[%s241 + $0xc8] sm:$0xff]
        %v320 = vld [vmem:[%s241 + $0xd0] sm:$0xff]
        %v321 = vld [vmem:[%s241 + $0xd8] sm:$0xff]
        %v322 = vld [vmem:[%s241 + $0xe0] sm:$0xff]
        %v323 = vld [vmem:[%s241 + $0xe8] sm:$0xff]
        %v324 = vld [vmem:[%s241 + $0xf0] sm:$0xff]
        %v325 = vld [vmem:[%s241 + $0xf8] sm:$0xff]
        %326 = vmatpush.msra.mxu0 %v309
        %327 = vmatpush.msra.mxu0 %v308
        %328 = vmatpush.msra.mxu0 %v307
        %329 = vmatpush.msra.mxu0 %v306
        %330 = vmatpush.msra.mxu0 %v305
        %331 = vmatpush.msra.mxu0 %v304
        %332 = vmatpush.msra.mxu0 %v303
        %333 = vmatpush.msra.mxu0 %v302
        %334 = vmatpush.msra.mxu0 %v301
        %335 = vmatpush.msra.mxu0 %v300
        %336 = vmatpush.msra.mxu0 %v299
        %337 = vmatpush.msra.mxu0 %v298
        %338 = vmatpush.msra.mxu0 %v297
        %339 = vmatpush.msra.mxu0 %v296
        %340 = vmatpush.msra.mxu0 %v295
        %341 = vmatpush.msra.mxu0 %v294
        %342 = vmatmul.f32.gmra.mxu0 %v290
        %v343 = vpop.f32.mrf.mxu0
        %v344 = vadd.f32 0.0, %v343
        %345 = vmatmul.f32.gmra.mxu0 %v292
        %v346 = vpop.f32.mrf.mxu0
        %v347 = vadd.f32 0.0, %v346
        %348 = vdwg.mxu0
        %349 = vmatpush.msra.mxu0 %v325
        %350 = vmatpush.msra.mxu0 %v324
        %351 = vmatpush.msra.mxu0 %v323
        %352 = vmatpush.msra.mxu0 %v322
        %353 = vmatpush.msra.mxu0 %v321
        %354 = vmatpush.msra.mxu0 %v320
        %355 = vmatpush.msra.mxu0 %v319
        %356 = vmatpush.msra.mxu0 %v318
        %357 = vmatpush.msra.mxu0 %v317
        %358 = vmatpush.msra.mxu0 %v316
        %359 = vmatpush.msra.mxu0 %v315
        %360 = vmatpush.msra.mxu0 %v314
        %361 = vmatpush.msra.mxu0 %v313
        %362 = vmatpush.msra.mxu0 %v312
        %363 = vmatpush.msra.mxu0 %v311
        %364 = vmatpush.msra.mxu0 %v310
        %365 = vmatmul.f32.gmra.mxu0 %v291
        %v366 = vpop.f32.mrf.mxu0
        %v367 = vadd.f32 %v344, %v366
        %368 = vmatmul.f32.gmra.mxu0 %v293
        %v369 = vpop.f32.mrf.mxu0
        %v370 = vadd.f32 %v347, %v369
        %371 = vdwg.mxu0
        %v372 = vadd.f32 %v288, %v367
        %v373 = vadd.f32 %v289, %v370
        %374 = vst [vmem:[#allocation2] sm:$0xff] %v372
        %375 = vst [vmem:[#allocation2 + $0x8] sm:$0xff] %v373
        // Predicated region
        $region49: #{tpu_custom_call.1} parent=31 // pred_check
          %p376 = pneg %p282
        $region50: #{tpu_custom_call.1} parent=31 // pred_check_branch
          %378 = sbr.rel (%p376) target = $region52
        $region51: #{tpu_custom_call.1} parent=31 // pred_region
          %v379 = vld [vmem:[#allocation2] sm:$0xff]
          %v380 = vld [vmem:[#allocation2 + $0x8] sm:$0xff]
          %v381 = vld [vmem:[%s250] sm:$0x1]
          %v383 = vperm.slane %v381, 0
          %v385 = vadd.f32 %v379, %v383
          %v386 = vadd.f32 %v380, %v383
          %387 = vst [vmem:[%s277] sm:$0xff] %v385
          %388 = vst [vmem:[%s277 + $0x8] sm:$0xff] %v386
        $region52: #{tpu_custom_call.1} parent=31 // pred_fallthru
          _
        %s389 = sand.u32 %s132, 1
        %s390 = scalar_lea.sflag [#allocation5], %s389
        %s391 = sand.u32 %s132, 1
        %s392 = smul.addr %s391, 16
        %s393 = scalar_lea.vmem [#allocation9], %s392
        // Predicated region
        $region53: #{tpu_custom_call.1} parent=31 // pred_check
          %p394 = pneg %p142
        $region54: #{tpu_custom_call.1} parent=31 // pred_check_branch
          %396 = sbr.rel (%p394) target = $region56
        $region55: #{tpu_custom_call.1} parent=31 // pred_region
          %s397 = smul.u32 2, %s26
          %399 = vsyncadd %s390, 0
          %s400 = smul.addr %s397, 5
          %s401 = sadd.s32 %s27, %s400
          %s402 = smul.addr %s401, 8
          %s403 = scalar_lea.hbm %s3, %s402
          %s404 = sshll.u32 %s393, 4
          %s405 = int_to_ptr.vmem [resolvable:$true] %s404
          %s406 = sshll.u32 %s403, 4
          %s407 = int_to_ptr.hbm [resolvable:$true] %s406
          %412 = dma.vmem_to_hbm [thread:$0]  %s405, 256, %s407, %s390, 128, 640, 8
        $region56: #{tpu_custom_call.1} parent=31 // pred_fallthru
          _
      $region32: #{tpu_custom_call.1} parent=5 // pred_fallthru
        _
      %p413 = scmp.le.s32.totalorder 2, %s16
      // Predicated region
      $region57: #{tpu_custom_call.1} parent=5 // pred_check
        %p414 = pneg %p413
      $region58: #{tpu_custom_call.1} parent=5 // pred_check_branch
        %416 = sbr.rel (%p414) target = $region60
      $region59: #{tpu_custom_call.1} parent=5 // pred_region
        %s417 = ssub.s32 %s16, 2
        // Predicated region
        $region61: #{tpu_custom_call.1} parent=59 // pred_check
          %p418 = pneg %p148
        $region62: #{tpu_custom_call.1} parent=59 // pred_check_branch
          %420 = sbr.rel (%p418) target = $region64
        $region63: #{tpu_custom_call.1} parent=59 // pred_region
          %s421 = sand.u32 %s133, 1
          %s422 = scalar_lea.sflag [#allocation5], %s421
          %s423 = sand.u32 %s133, 1
          %s424 = smul.addr %s423, 16
          %s425 = scalar_lea.vmem [#allocation9], %s424
          %427 = dma.done %s422, 256
        $region64: #{tpu_custom_call.1} parent=59 // pred_fallthru
          _
      $region60: #{tpu_custom_call.1} parent=5 // pred_fallthru
        _
    $region6: #{tpu_custom_call.1} parent=1 // loop_footer
      %s20 = sadd.s32 1, %s16
    $region7: #{tpu_custom_call.1} parent=1 // loop_footer_branch
      %15 = sbr.rel target = $region3
    $region8: #{tpu_custom_call.1} parent=1 // loop_exit
      _
    %428 = vsyncpa [#allocation4], 1
    %s429 = scalar_lea.sflag [#allocation4], 1
    %430 = vsyncpa %s429, 1
    %431 = vsyncpa [#allocation7], 1
    %s432 = scalar_lea.sflag [#allocation7], 1
    %433 = vsyncpa %s432, 1
    %434 = vsyncpa [#allocation5], 1
    %s435 = scalar_lea.sflag [#allocation5], 1
    %436 = vsyncpa %s435, 1

</llo_original>
